<compile_context>
chip_gen: v5e
topology: v5e:2x2
jax: 0.10.0
libtpu: 0.0.40
codegen_flags: <defaults>
</compile_context>

<pallas_src>
import jax
import jax.numpy as jnp
from jax import lax
from jax.experimental import pallas as pl
from jax.experimental.pallas import tpu as pltpu


_LANE = 128
_SUBLANE = 8
_SLACK_BYTES = 2 * 1024 * 1024          # internal scratch / headroom


def _round_up(x, m):
    return ((x + m - 1) // m) * m


def _detected_vmem_capacity():
    """Physical per-core VMEM bytes, or None if it cannot be queried."""
    try:
        info = pltpu.get_tpu_info()
        cap = getattr(info, "vmem_capacity_bytes", None)
        if cap:
            return int(cap)
    except Exception:
        pass
    return None


def _default_vmem_budget():
    # Generation aware: ~96 MiB on v5e/v6e (128 MiB VMEM), ~48 MiB on v7x (64 MiB).
    cap = _detected_vmem_capacity()
    if cap is not None:
        return int(0.75 * cap)
    return 48 * 1024 * 1024             # conservative default (covers v7x)


def _fast_step_bytes(tb, ncp, cdp, itemsize):
    """Per-grid-step VMEM for the one-hot fast path (excludes the table)."""
    return (2 * tb * cdp * itemsize      # output tile, double buffered
            + 2 * tb * _LANE * 4         # (tb, 1) int32 id tile (lane padded), x2
            + 2 * tb * ncp * 4           # iota + one-hot f32 temporaries
            + tb * cdp * 4)              # f32 matmul result before the cast


def _pick_batch_tile(batch, ncp, cdp, itemsize, avail_bytes):
    # Largest tile that fits the remaining VMEM: bigger tiles push output
    # writeback toward the HBM roofline and amortize per-step overhead.
    cap = _round_up(max(batch, 1), _SUBLANE)
    for tb in (1024, 512, 256, 128, 64, 32, 16, 8):
        if tb > cap:
            continue
        if _fast_step_bytes(tb, ncp, cdp, itemsize) <= avail_bytes:
            return tb
    return _SUBLANE


# ---------------- fast path: VMEM-resident table + one-hot MXU gather --------


def _onehot_gather_kernel(cls_ref, emb_ref, o_ref):
    # cls_ref: (tb, 1) int32 class ids for this batch tile.
    # emb_ref: (ncp, cdp) padded table, VMEM-resident (constant index_map).
    # o_ref:   (tb, cdp) lane-dense output tile (unmasked stores).
    tb = o_ref.shape[0]
    ncp = emb_ref.shape[0]
    cls_tile = cls_ref[...]                                   # (tb, 1)
    iota = lax.broadcasted_iota(jnp.int32, (tb, ncp), 1)      # (tb, ncp)
    onehot = (iota == cls_tile).astype(emb_ref.dtype)
    o_ref[...] = jnp.dot(
        onehot, emb_ref[...], preferred_element_type=jnp.float32
    ).astype(o_ref.dtype)


# ---------------- fallback: R rows per step via data-dependent DMA -----------


def _dma_gather_kernel(cls_smem, emb_hbm, o_ref, row_buf, sems):
    # cls_smem: (padded_batch,) int32 class ids in SMEM (scalar prefetch).
    # emb_hbm:  (n_class, cdp) table left in HBM.
    # o_ref:    (rows, cdp) output tile; row_buf: VMEM scratch of same shape.
    step = pl.program_id(0)
    rows = o_ref.shape[0]
    base = step * rows
    copies = []
    for r in range(rows):            # static unroll: `rows` is a small constant
        row_id = cls_smem[base + r]
        cp = pltpu.make_async_copy(emb_hbm.at[row_id], row_buf.at[r], sems.at[r])
        cp.start()
        copies.append(cp)
    for cp in copies:
        cp.wait()
    o_ref[...] = row_buf[...]


# ---------------------------------- wrapper ----------------------------------


def class_embedding(cls, cls_emb, *, batch_tile=None,
                    table_vmem_budget_bytes=None,
                    max_onehot_classes=4096,
                    fallback_rows_per_step=None):
    """out = cls_emb[cls]  (PyTorch ClassEmbedding.forward).

    Note: out-of-range ids are clamped into [0, n_class) instead of raising
    (PyTorch indexing would error) -- a documented safety divergence.
    """
    cls_shape = cls.shape
    batch = 1
    for d in cls_shape:
        batch *= d
    n_class, cond_dim = cls_emb.shape
    out_dtype = cls_emb.dtype
    itemsize = jnp.dtype(out_dtype).itemsize

    cls_i32 = jnp.clip(cls.reshape(batch).astype(jnp.int32), 0, n_class - 1)

    # Lane-pad the embedding width to a multiple of 128 only when needed.
    # TODO(synk): callers that own the parameter can pre-pad it once and skip
    # this per-call pad / the trailing slice entirely.
    cdp = _round_up(cond_dim, _LANE)
    emb_p = cls_emb if cdp == cond_dim else jnp.pad(
        cls_emb, ((0, 0), (0, cdp - cond_dim)))

    # Contraction dim only needs lane alignment (128), not 256.
    ncp = _round_up(max(n_class, _LANE), _LANE)

    budget = (int(table_vmem_budget_bytes) if table_vmem_budget_bytes is not None
              else _default_vmem_budget())

    table_bytes = ncp * cdp * itemsize            # single-buffered (Buffered(1))
    min_need = (table_bytes + _fast_step_bytes(_SUBLANE, ncp, cdp, itemsize)
                + _SLACK_BYTES)
    # NCP cutover: one-hot gather is O(ncp) MACs per output row, so very large
    # class counts go to the DMA gather even if the table would fit VMEM.
    use_fast = (min_need <= budget) and (ncp <= max_onehot_classes)

    if use_fast:
        if batch_tile is None:
            tb = _pick_batch_tile(batch, ncp, cdp, itemsize,
                                  budget - table_bytes - _SLACK_BYTES)
        else:
            tb = max(_SUBLANE, _round_up(int(batch_tile), _SUBLANE))
        padded_batch = _round_up(batch, tb)
        cls_padded = (cls_i32 if padded_batch == batch
                      else jnp.pad(cls_i32, (0, padded_batch - batch)))
        cls2d = cls_padded.reshape(padded_batch, 1)
        emb_pp = emb_p if ncp == n_class else jnp.pad(
            emb_p, ((0, ncp - n_class), (0, 0)))

        vmem_needed = (table_bytes + _fast_step_bytes(tb, ncp, cdp, itemsize)
                       + _SLACK_BYTES)
        vmem_limit = max(vmem_needed, 32 * 1024 * 1024)
        cap = _detected_vmem_capacity()
        if cap is not None:
            vmem_limit = min(vmem_limit, cap)

        out = pl.pallas_call(
            _onehot_gather_kernel,
            out_shape=jax.ShapeDtypeStruct((padded_batch, cdp), out_dtype),
            grid_spec=pl.GridSpec(
                grid=(padded_batch // tb,),
                in_specs=[
                    pl.BlockSpec((tb, 1), lambda i: (i, 0)),
                    # Constant index_map: table DMA'd once, reused every step;
                    # Buffered(1) halves its VMEM footprint (no useless 2nd copy).
                    pl.BlockSpec((ncp, cdp), lambda i: (0, 0),
                                 pipeline_mode=pl.Buffered(1)),
                ],
                out_specs=pl.BlockSpec((tb, cdp), lambda i: (i, 0)),
            ),
            compiler_params=pltpu.CompilerParams(
                dimension_semantics=("parallel",),   # shards across v7x TCs
                vmem_limit_bytes=int(vmem_limit)),
        )(cls2d, emb_pp)
    else:
        # Table stays in HBM; gather `rows` rows per grid step with
        # data-dependent async DMAs driven by scalar-prefetched ids.
        if fallback_rows_per_step is None:
            rows = 32 if batch >= 32 else _SUBLANE
        else:
            rows = max(_SUBLANE, _round_up(int(fallback_rows_per_step), _SUBLANE))
        padded_batch = _round_up(batch, rows)
        cls_padded = (cls_i32 if padded_batch == batch
                      else jnp.pad(cls_i32, (0, padded_batch - batch)))

        grid_spec = pltpu.PrefetchScalarGridSpec(
            num_scalar_prefetch=1,                       # ids land in SMEM
            grid=(padded_batch // rows,),
            in_specs=[pl.BlockSpec(memory_space=pl.ANY)],  # table stays in HBM
            out_specs=pl.BlockSpec((rows, cdp), lambda i, cls_ref: (i, 0)),
            scratch_shapes=[pltpu.VMEM((rows, cdp), out_dtype),
                            pltpu.SemaphoreType.DMA((rows,))],
        )
        out = pl.pallas_call(
            _dma_gather_kernel,
            out_shape=jax.ShapeDtypeStruct((padded_batch, cdp), out_dtype),
            grid_spec=grid_spec,
            compiler_params=pltpu.CompilerParams(
                dimension_semantics=("parallel",)),      # rows independent; v7x TCs
        )(cls_padded, emb_p)

    if padded_batch != batch or cdp != cond_dim:
        out = out[:batch, :cond_dim]
    return out.reshape(*cls_shape, cond_dim)


if __name__ == "__main__":
    key = jax.random.PRNGKey(0)
    k_emb1, k_cls1, k_emb2, k_cls2 = jax.random.split(key, 4)

    # Case 1: small shapes implied by the module (lane-exact width).
    n_class, cond_dim, batch = 10, 128, 8
    # nn.Parameter(torch.zeros(...)) is all-zeros at init; use random values so
    # the gather is non-trivially checkable (same shape/dtype as the parameter).
    cls_emb = jax.random.normal(k_emb1, (n_class, cond_dim), dtype=jnp.float32)
    cls = jax.random.randint(k_cls1, (batch,), 0, n_class, dtype=jnp.int32)
    ref = cls_emb[cls]

    out_fast = jax.block_until_ready(class_embedding(cls, cls_emb))
    assert out_fast.shape == ref.shape and out_fast.dtype == ref.dtype
    assert jnp.allclose(out_fast, ref, atol=1e-6, rtol=1e-6)

    # Force the HBM / data-dependent-DMA fallback path.
    out_fb = jax.block_until_ready(
        class_embedding(cls, cls_emb, table_vmem_budget_bytes=0))
    assert jnp.array_equal(out_fb, ref)

    # Case 2: non-multiple-of-128 width and non-multiple-of-tile batch
    # (exercises lane padding, batch padding and the trailing slice).
    n_class2, cond_dim2, batch2 = 12, 96, 20
    cls_emb2 = jax.random.normal(k_emb2, (n_class2, cond_dim2), dtype=jnp.float32)
    cls2 = jax.random.randint(k_cls2, (batch2,), 0, n_class2, dtype=jnp.int32)
    ref2 = cls_emb2[cls2]

    out2 = jax.block_until_ready(class_embedding(cls2, cls_emb2))
    assert out2.shape == ref2.shape
    assert jnp.allclose(out2, ref2, atol=1e-6, rtol=1e-6)

    out2_fb = jax.block_until_ready(
        class_embedding(cls2, cls_emb2, table_vmem_budget_bytes=0))
    assert jnp.array_equal(out2_fb, ref2)

    print("KERNEL_OK")
</pallas_src>

<mosaic_0001>
module attributes {stable_mosaic.version = 11 : i64} {
  func.func @_onehot_gather_kernel(%arg0: i32, %arg1: memref<8x1xi32, #tpu.memory_space<vmem>>, %arg2: memref<128x128xf32, #tpu.memory_space<vmem>>, %arg3: memref<8x128xf32, #tpu.memory_space<vmem>>) attributes {dimension_semantics = [#tpu.dimension_semantics<parallel>], iteration_bounds = array<i64: 1>, scalar_prefetch = 0 : i64, scratch_operands = 0 : i64, tpu.core_type = #tpu.core_type<tc>, window_params = [{transform_indices = @transform_0, window_bounds = array<i64: 8, 1>}, {pipeline_mode = #tpu.pipeline_mode<synchronous>, transform_indices = @transform_1, window_bounds = array<i64: 128, 128>}, {transform_indices = @transform_2, window_bounds = array<i64: 8, 128>}]} {
    %c0 = arith.constant 0 : index
    %c0_0 = arith.constant 0 : index
    %0 = vector.load %arg1[%c0, %c0_0] : memref<8x1xi32, #tpu.memory_space<vmem>>, vector<8x1xi32>
    %1 = tpu.iota {dimensions = array<i32: 1>} : vector<8x128xi32>
    %2 = vector.broadcast %0 : vector<8x1xi32> to vector<8x128xi32>
    %3 = arith.cmpi eq, %1, %2 : vector<8x128xi32>
    %4 = arith.extui %3 : vector<8x128xi1> to vector<8x128xi32>
    %5 = arith.sitofp %4 : vector<8x128xi32> to vector<8x128xf32>
    %c0_1 = arith.constant 0 : index
    %c0_2 = arith.constant 0 : index
    %6 = vector.load %arg2[%c0_1, %c0_2] : memref<128x128xf32, #tpu.memory_space<vmem>>, vector<128x128xf32>
    %cst = arith.constant dense<0.000000e+00> : vector<8x128xf32>
    %7 = tpu.matmul %5, %6, %cst {dimension_numbers = #tpu.dot_dimension_numbers<[1], [0], [0], [1], [0, 0, 1, 1], [], []>} : vector<8x128xf32>, vector<128x128xf32>, vector<8x128xf32> -> vector<8x128xf32>
    %c0_3 = arith.constant 0 : index
    %c0_4 = arith.constant 0 : index
    %8 = vector.load %arg3[%c0_3, %c0_4] : memref<8x128xf32, #tpu.memory_space<vmem>>, vector<8x128xf32>
    tpu.vector_store %arg3[%c0_3, %c0_4], %7 {strides = array<i32>} : memref<8x128xf32, #tpu.memory_space<vmem>>, vector<8x128xf32>,
    return
  }
  func.func @transform_0(%arg0: i32) -> (i32, i32) {
    %c0_i32 = arith.constant 0 : i32
    %c0_i32_0 = arith.constant 0 : i32
    return %arg0, %c0_i32 : i32, i32
  }
  func.func @transform_1(%arg0: i32) -> (i32, i32) {
    %c0_i32 = arith.constant 0 : i32
    %c0_i32_0 = arith.constant 0 : i32
    %c0_i32_1 = arith.constant 0 : i32
    return %c0_i32, %c0_i32_0 : i32, i32
  }
  func.func @transform_2(%arg0: i32) -> (i32, i32) {
    %c0_i32 = arith.constant 0 : i32
    %c0_i32_0 = arith.constant 0 : i32
    return %arg0, %c0_i32 : i32, i32
  }
}

</mosaic_0001>

<llo_original>
// kernel: tpu_custom_call.1
$region0: #{tpu_custom_call.1}
  #allocation0 [shape = 'u32[]', space=smem, size = 0x4, offset = 0x4, fixed_abs, tag = 'smem constant byte address 0x4 - core index']
  #allocation1 [shape = 'u32[72,128]{1,0:T(1,128)}', space=vmem, size = 0x9000, scoped, tag = 'internal scratch']
  %s0 = inlined_call_operand.vmem [shape: s32[8,1], index: 0, kind: input, shape index: {}]
  %s1 = inlined_call_operand.hbm [shape: f32[128,128], index: 1, kind: input, shape index: {}]
  %s2 = inlined_call_operand.hbm [shape: f32[8,128], index: 2, kind: output, shape index: {}]
  %s3 = sld [smem:[#allocation0]]
  $region22: #{tpu_custom_call.1} parent=0
    _
  %s5 = ssub.s32 1, %s3
  %s6 = scalar_select 0, %s5, %s3
  $region1: #{tpu_custom_call.1} parent=0
    #allocation2 [shape = 'u8[65536]{0}', space=vmem, size = 0x10000, scoped, tag = 'input window, operand 1, single buffered']
    #allocation3 [shape = 's32[1]{0}', space=sflag, size = 0x4, scoped, tag = 'scoped memory for tpu_custom_call.1']
    #allocation4 [shape = 's32[1]{0}', space=sflag, size = 0x4, scoped, tag = 'scoped memory for tpu_custom_call.1']
    #allocation5 [shape = 'u8[4096]{0}', space=vmem, size = 0x1000, scoped, tag = 'output window, operand 0, single buffered']
    %7 = vsyncpa [#allocation3], 0
    %8 = vsyncpa [#allocation4], 0
    // Predicated region
    $region2: #{tpu_custom_call.1} parent=1 // pred_check
      _
    $region3: #{tpu_custom_call.1} parent=1 // pred_check_branch
      %10 = sbr.rel (0) target = $region5
    $region4: #{tpu_custom_call.1} parent=1 // pred_region
      _
    $region5: #{tpu_custom_call.1} parent=1 // pred_fallthru
      _
    // Predicated region
    $region6: #{tpu_custom_call.1} parent=1 // pred_check
      _
    $region7: #{tpu_custom_call.1} parent=1 // pred_check_branch
      %12 = sbr.rel (0) target = $region9
    $region8: #{tpu_custom_call.1} parent=1 // pred_region
      %14 = vsyncadd [#allocation3], 0
      %s15 = sshll.u32 %s1, 4
      %s16 = int_to_ptr.hbm [resolvable:$true] %s15
      %s17 = sshll.u32 [#allocation2], 4
      %s18 = int_to_ptr.vmem [resolvable:$true] %s17
      %23 = dma.hbm_to_vmem [thread:$0]  %s16, 2048, %s18, [#allocation3], 128, 128, 8
    $region9: #{tpu_custom_call.1} parent=1 // pred_fallthru
      _
    // Predicated region
    $region10: #{tpu_custom_call.1} parent=1 // pred_check
      _
    $region11: #{tpu_custom_call.1} parent=1 // pred_check_branch
      %25 = sbr.rel (0) target = $region13
    $region12: #{tpu_custom_call.1} parent=1 // pred_region
      %27 = dma.done [#allocation3], 2048
    $region13: #{tpu_custom_call.1} parent=1 // pred_fallthru
      _
    %v28 = vld [vmem:[%s0] sm:$0xff]
    %v29 = vlaneseq
    %v30 = vand.u32 %v29, 127
    %31 = vset.pattern.permute.xlu0 0
    %32 = vperm.xlu0 %31, %v28
    %v33 = vpop.permute.xlu0 %32
    %vm34 = vcmp.eq.s32.totalorder %v30, %v33
    %v35 = vsel %vm34, 1, 0
    %v36 = vcvt.s32.f32 %v35
    %v37 = vld [vmem:[#allocation2] sm:$0xff]
    %v38 = vld [vmem:[#allocation2 + $0x8] sm:$0xff]
    %v39 = vld [vmem:[#allocation2 + $0x10] sm:$0xff]
    %v40 = vld [vmem:[#allocation2 + $0x18] sm:$0xff]
    %v41 = vld [vmem:[#allocation2 + $0x20] sm:$0xff]
    %v42 = vld [vmem:[#allocation2 + $0x28] sm:$0xff]
    %v43 = vld [vmem:[#allocation2 + $0x30] sm:$0xff]
    %v44 = vld [vmem:[#allocation2 + $0x38] sm:$0xff]
    %v45 = vld [vmem:[#allocation2 + $0x40] sm:$0xff]
    %v46 = vld [vmem:[#allocation2 + $0x48] sm:$0xff]
    %v47 = vld [vmem:[#allocation2 + $0x50] sm:$0xff]
    %v48 = vld [vmem:[#allocation2 + $0x58] sm:$0xff]
    %v49 = vld [vmem:[#allocation2 + $0x60] sm:$0xff]
    %v50 = vld [vmem:[#allocation2 + $0x68] sm:$0xff]
    %v51 = vld [vmem:[#allocation2 + $0x70] sm:$0xff]
    %v52 = vld [vmem:[#allocation2 + $0x78] sm:$0xff]
    %53 = vmatpush.msra.mxu0 %v52
    %54 = vmatpush.msra.mxu0 %v51
    %55 = vmatpush.msra.mxu0 %v50
    %56 = vmatpush.msra.mxu0 %v49
    %57 = vmatpush.msra.mxu0 %v48
    %58 = vmatpush.msra.mxu0 %v47
    %59 = vmatpush.msra.mxu0 %v46
    %60 = vmatpush.msra.mxu0 %v45
    %61 = vmatpush.msra.mxu0 %v44
    %62 = vmatpush.msra.mxu0 %v43
    %63 = vmatpush.msra.mxu0 %v42
    %64 = vmatpush.msra.mxu0 %v41
    %65 = vmatpush.msra.mxu0 %v40
    %66 = vmatpush.msra.mxu0 %v39
    %67 = vmatpush.msra.mxu0 %v38
    %68 = vmatpush.msra.mxu0 %v37
    %69 = vmatmul.f32.gmra.mxu0 %v36
    %v70 = vpop.f32.mrf.mxu0
    %v71 = vadd.f32 0.0, %v70
    %72 = vdwg.mxu0
    %73 = vst [vmem:[#allocation5] sm:$0xff] %v71
    // Predicated region
    $region14: #{tpu_custom_call.1} parent=1 // pred_check
      _
    $region15: #{tpu_custom_call.1} parent=1 // pred_check_branch
      %75 = sbr.rel (0) target = $region17
    $region16: #{tpu_custom_call.1} parent=1 // pred_region
      %77 = vsyncadd [#allocation4], 0
      %s79 = sshll.u32 [#allocation5], 4
      %s80 = int_to_ptr.vmem [resolvable:$true] %s79
      %s81 = sshll.u32 %s2, 4
      %s82 = int_to_ptr.hbm [resolvable:$true] %s81
      %84 = dma.vmem_to_hbm [thread:$0]  %s80, 128, %s82, [#allocation4]
    $region17: #{tpu_custom_call.1} parent=1 // pred_fallthru
      _
    // Predicated region
    $region18: #{tpu_custom_call.1} parent=1 // pred_check
      _
    $region19: #{tpu_custom_call.1} parent=1 // pred_check_branch
      %86 = sbr.rel (0) target = $region21
    $region20: #{tpu_custom_call.1} parent=1 // pred_region
      %88 = dma.done [#allocation4], 128
    $region21: #{tpu_custom_call.1} parent=1 // pred_fallthru
      _
    %89 = vsyncpa [#allocation3], 1
    %90 = vsyncpa [#allocation4], 1

</llo_original>
